<compile_context>
chip_gen: v7x
topology: tpu7x:2x2x1
jax: 0.10.0
libtpu: 0.0.40
codegen_flags: <defaults>
</compile_context>

<pallas_src>
import math

import jax
import jax.numpy as jnp
from jax.experimental import pallas as pl
from jax.experimental.pallas import tpu as pltpu

# Physical constants from the module (float32)
_N_AMORPHOUS_IMAG = 0.3
_N_CRYSTALLINE_IMAG = 0.9
_WAVELENGTH = 1.55e-06
_THICKNESS = 1e-07


def _pcm_kernel(t_ref, x_ref, o_ref):
    # t_ref : SMEM (1,) float32  -- precomputed transmission scalar
    # x_ref : VMEM (tile_m, lanes), native signal dtype
    # o_ref : VMEM (tile_m, lanes), native signal dtype
    t = t_ref[0]
    # Widen per-vreg (free VALU filler under the DMA bottleneck; required on v5e
    # for non-f32 inputs), multiply, cast back to the HBM-resident dtype.
    o_ref[...] = (x_ref[...].astype(jnp.float32) * t).astype(o_ref.dtype)


def _transmission(pcm_state: jax.Array) -> jax.Array:
    """Scalar PCM transmission, computed once in the wrapper (f32)."""
    state = jnp.clip(pcm_state.astype(jnp.float32), 0.0, 1.0)
    n_imag = (1.0 - state) * _N_AMORPHOUS_IMAG + state * _N_CRYSTALLINE_IMAG
    return jnp.exp(-4.0 * math.pi * n_imag / _WAVELENGTH * _THICKNESS)  # (1,)


def phase_change_cell_forward(
    optical_signal: jax.Array,
    pcm_state: jax.Array,
    *,
    block_bytes: int = 2 * 1024 * 1024,
) -> jax.Array:
    """Apply PCM modulation to an optical signal.

    optical_signal: array of any shape / float dtype (NCHW at the call site).
    pcm_state:      float array of shape (1,) (the learnable parameter).
    """
    orig_shape = optical_signal.shape
    dtype = optical_signal.dtype
    n = optical_signal.size

    # Free 2D view (no pad, no copy): lane-dense (rows, 128) when possible,
    # otherwise collapse leading dims and keep the natural last dim.
    if n % 128 == 0:
        lanes = 128
    elif len(orig_shape) >= 2:
        lanes = orig_shape[-1]
    else:
        lanes = max(n, 1)
    rows = n // lanes
    x2d = optical_signal.reshape(rows, lanes)

    # Choose a ~block_bytes tile over rows (multiple of 8); fall back to a
    # single full-dim block for small inputs.
    itemsize = jnp.dtype(dtype).itemsize
    tile_m = (block_bytes // (lanes * itemsize)) // 8 * 8
    if tile_m < 8 or tile_m >= rows:
        tile_m = rows  # block == full array dims (always legal)

    grid = (pl.cdiv(rows, tile_m),)  # ragged tail handled by Pallas masking

    t = _transmission(pcm_state)  # (1,) f32 scalar, hoisted out of the kernel

    out2d = pl.pallas_call(
        _pcm_kernel,
        out_shape=jax.ShapeDtypeStruct((rows, lanes), dtype),
        grid_spec=pltpu.PrefetchScalarGridSpec(
            num_scalar_prefetch=0,
            grid=grid,
            in_specs=[
                pl.BlockSpec(memory_space=pltpu.SMEM),            # transmission
                pl.BlockSpec((tile_m, lanes), lambda i: (i, 0)),  # signal tile
            ],
            out_specs=pl.BlockSpec((tile_m, lanes), lambda i: (i, 0)),
        ),
        compiler_params=pltpu.CompilerParams(
            dimension_semantics=("parallel",),
        ),
    )(t, x2d)

    return out2d.reshape(orig_shape)


def _reference_forward(optical_signal, pcm_state):
    state = jnp.clip(pcm_state.astype(jnp.float32), 0.0, 1.0)
    n_imag = (1.0 - state) * _N_AMORPHOUS_IMAG + state * _N_CRYSTALLINE_IMAG
    transmission = jnp.exp(-4.0 * math.pi * n_imag / _WAVELENGTH * _THICKNESS)
    return (optical_signal.astype(jnp.float32) * transmission).astype(
        optical_signal.dtype
    )


if __name__ == "__main__":
    key = jax.random.PRNGKey(0)
    k1, k2, k3 = jax.random.split(key, 3)

    # Module default initial_state is 0.0; use 0.5 so clamp/interp are exercised.
    pcm_state = jnp.array([0.5], dtype=jnp.float32)

    # 1) Small NCHW optical signal (lane-dense path, single block).
    x = jax.random.normal(k1, (2, 4, 16, 16), dtype=jnp.float32)
    out = jax.block_until_ready(phase_change_cell_forward(x, pcm_state))
    ref = _reference_forward(x, pcm_state)
    assert out.shape == x.shape and out.dtype == x.dtype
    assert jnp.allclose(out, ref, rtol=1e-6, atol=1e-6)

    # 2) Ragged shape (total not 128-aligned) -> natural (B*C*H, W) view path.
    x_r = jax.random.normal(k2, (3, 5, 7, 11), dtype=jnp.float32)
    out_r = jax.block_until_ready(phase_change_cell_forward(x_r, pcm_state))
    assert jnp.allclose(out_r, _reference_forward(x_r, pcm_state), rtol=1e-6, atol=1e-6)

    # 3) Multi-block grid with a ragged final block (tiny block_bytes forces
    #    rows=20, tile_m=8, grid=3) -> exercises the coverage fix.
    x_m = jax.random.normal(k3, (1, 1, 20, 128), dtype=jnp.float32)
    out_m = jax.block_until_ready(
        phase_change_cell_forward(x_m, pcm_state, block_bytes=8 * 128 * 4)
    )
    assert jnp.allclose(out_m, _reference_forward(x_m, pcm_state), rtol=1e-6, atol=1e-6)

    print("KERNEL_OK")
</pallas_src>

<mosaic_0001>
module attributes {stable_mosaic.version = 11 : i64} {
  func.func @_pcm_kernel(%arg0: i32, %arg1: memref<1xf32, #tpu.memory_space<smem>>, %arg2: memref<16x128xf32, #tpu.memory_space<vmem>>, %arg3: memref<16x128xf32, #tpu.memory_space<vmem>>) attributes {dimension_semantics = [#tpu.dimension_semantics<parallel>], iteration_bounds = array<i64: 1>, scalar_prefetch = 0 : i64, scratch_operands = 0 : i64, tpu.core_type = #tpu.core_type<tc>, window_params = [{transform_indices = @transform_0, window_bounds = array<i64: 1>}, {transform_indices = @transform_1, window_bounds = array<i64: 16, 128>}, {transform_indices = @transform_2, window_bounds = array<i64: 16, 128>}]} {
    %c0 = arith.constant 0 : index
    %0 = memref.load %arg1[%c0] : memref<1xf32, #tpu.memory_space<smem>>
    %c0_0 = arith.constant 0 : index
    %c0_1 = arith.constant 0 : index
    %1 = vector.load %arg2[%c0_0, %c0_1] : memref<16x128xf32, #tpu.memory_space<vmem>>, vector<16x128xf32>
    %2 = vector.broadcast %0 : f32 to vector<16x128xf32>
    %3 = arith.mulf %1, %2 : vector<16x128xf32>
    %c0_2 = arith.constant 0 : index
    %c0_3 = arith.constant 0 : index
    %4 = vector.load %arg3[%c0_2, %c0_3] : memref<16x128xf32, #tpu.memory_space<vmem>>, vector<16x128xf32>
    tpu.vector_store %arg3[%c0_2, %c0_3], %3 {strides = array<i32>} : memref<16x128xf32, #tpu.memory_space<vmem>>, vector<16x128xf32>,
    return
  }
  func.func @transform_0(%arg0: i32) -> i32 {
    %c0_i32 = arith.constant 0 : i32
    %c0_i32_0 = arith.constant 0 : i32
    return %c0_i32 : i32
  }
  func.func @transform_1(%arg0: i32) -> (i32, i32) {
    %c0_i32 = arith.constant 0 : i32
    %c0_i32_0 = arith.constant 0 : i32
    return %arg0, %c0_i32 : i32, i32
  }
  func.func @transform_2(%arg0: i32) -> (i32, i32) {
    %c0_i32 = arith.constant 0 : i32
    %c0_i32_0 = arith.constant 0 : i32
    return %arg0, %c0_i32 : i32, i32
  }
}

</mosaic_0001>

<llo_original>
// kernel: tpu_custom_call.1
$region0: #{tpu_custom_call.1}
  #allocation0 [shape = 'u32[]', space=smem, size = 0x4, offset = 0x4, fixed_abs, tag = 'smem constant byte address 0x4 - core index']
  #allocation1 [shape = 'u32[144,128]{1,0:T(1,128)}', space=vmem, size = 0x12000, scoped, tag = 'internal scratch']
  #allocation2 [shape = 'f32[1]{0:T(128)S(6)}', space=smem, size = 0x200, scoped, tag = 'scoped memory for tpu_custom_call.1']
  %s0 = inlined_call_operand.<no memory space> [shape: f32[1], index: 0, kind: input, shape index: {}]
  %s1 = inlined_call_operand.hbm [shape: f32[16,128], index: 1, kind: input, shape index: {}]
  %s2 = inlined_call_operand.hbm [shape: f32[16,128], index: 2, kind: output, shape index: {}]
  %s3 = sld [smem:[#allocation0]]
  $region22: #{tpu_custom_call.1} parent=0
    _
  %s5 = ssub.s32 1, %s3
  %s6 = scalar_select 0, %s5, %s3
  %7 = sst [smem:[#allocation2]] %s0
  $region1: #{tpu_custom_call.1} parent=0
    #allocation3 [shape = 'u8[8192]{0}', space=vmem, size = 0x2000, scoped, tag = 'input window, operand 1, single buffered']
    #allocation4 [shape = 's32[1]{0}', space=sflag, size = 0x4, scoped, tag = 'scoped memory for tpu_custom_call.1']
    #allocation5 [shape = 's32[1]{0}', space=sflag, size = 0x4, scoped, tag = 'scoped memory for tpu_custom_call.1']
    #allocation6 [shape = 'u8[8192]{0}', space=vmem, size = 0x2000, scoped, tag = 'output window, operand 0, single buffered']
    %8 = vsyncpa [#allocation4], 0
    %9 = vsyncpa [#allocation5], 0
    // Predicated region
    $region2: #{tpu_custom_call.1} parent=1 // pred_check
      _
    $region3: #{tpu_custom_call.1} parent=1 // pred_check_branch
      %11 = sbr.rel (0) target = $region5
    $region4: #{tpu_custom_call.1} parent=1 // pred_region
      _
    $region5: #{tpu_custom_call.1} parent=1 // pred_fallthru
      _
    // Predicated region
    $region6: #{tpu_custom_call.1} parent=1 // pred_check
      _
    $region7: #{tpu_custom_call.1} parent=1 // pred_check_branch
      %13 = sbr.rel (0) target = $region9
    $region8: #{tpu_custom_call.1} parent=1 // pred_region
      %s15 = ssub.s32 256, 256
      %16 = vsyncadd [#allocation4], %s15
      %s17 = sshll.u32 [#allocation3], 4
      %s18 = int_to_ptr.vmem [resolvable:$true] %s17
      %23 = dma.hbm_to_vmem [thread:$0]  %s1, 256, %s18, [#allocation4], 128, 128, 8
    $region9: #{tpu_custom_call.1} parent=1 // pred_fallthru
      _
    // Predicated region
    $region10: #{tpu_custom_call.1} parent=1 // pred_check
      _
    $region11: #{tpu_custom_call.1} parent=1 // pred_check_branch
      %25 = sbr.rel (0) target = $region13
    $region12: #{tpu_custom_call.1} parent=1 // pred_region
      %26 = dma.done [#allocation4], 256
    $region13: #{tpu_custom_call.1} parent=1 // pred_fallthru
      _
    %s27 = sld [smem:[#allocation2]]
    %v28 = vld [vmem:[#allocation3] sm:$0xff]
    %v29 = vld [vmem:[#allocation3 + $0x8] sm:$0xff]
    %v30 = vstv %s27
    %v31 = vmul.f32 %v28, %v30
    %v32 = vmul.f32 %v29, %v30
    %33 = vst [vmem:[#allocation6] sm:$0xff] %v31
    %34 = vst [vmem:[#allocation6 + $0x8] sm:$0xff] %v32
    // Predicated region
    $region14: #{tpu_custom_call.1} parent=1 // pred_check
      _
    $region15: #{tpu_custom_call.1} parent=1 // pred_check_branch
      %36 = sbr.rel (0) target = $region17
    $region16: #{tpu_custom_call.1} parent=1 // pred_region
      %s38 = ssub.s32 256, 256
      %39 = vsyncadd [#allocation5], %s38
      %s40 = sshll.u32 [#allocation6], 4
      %s41 = int_to_ptr.vmem [resolvable:$true] %s40
      %46 = dma.vmem_to_hbm [thread:$0]  %s41, 256, %s2, [#allocation5], 128, 128, 8
    $region17: #{tpu_custom_call.1} parent=1 // pred_fallthru
      _
    // Predicated region
    $region18: #{tpu_custom_call.1} parent=1 // pred_check
      _
    $region19: #{tpu_custom_call.1} parent=1 // pred_check_branch
      %48 = sbr.rel (0) target = $region21
    $region20: #{tpu_custom_call.1} parent=1 // pred_region
      %49 = dma.done [#allocation5], 256
    $region21: #{tpu_custom_call.1} parent=1 // pred_fallthru
      _
    %50 = vsyncpa [#allocation4], 1
    %51 = vsyncpa [#allocation5], 1

</llo_original>
